<compile_context>
chip_gen: v7x
topology: tpu7x:2x2x1
jax: 0.10.0
libtpu: 0.0.40
codegen_flags: <defaults>
</compile_context>

<pallas_src>
import jax
import jax.numpy as jnp
from jax.experimental import pallas as pl
from jax.experimental.pallas import tpu as pltpu

NUM_EMBEDDINGS = 512
EMBEDDING_DIM = 64
COMMITMENT_COST = 0.25

ROW_TILE = 1024   # max columns of x^T (rows of the flat input) per grid step
LANE = 128        # lane width; TN must be a multiple of this
K_CHUNK = 128     # codebook rows per argmax-carry step (K must divide evenly)


def vq_argmin_kernel(xt_ref, e_ref, bias_ref, idx_ref):
    xt = xt_ref[...]        # (D, TN)  bf16  column tile of x^T
    e = e_ref[...]          # (K, D)   bf16  codebook (resident; block idx fixed)
    bias = bias_ref[...]    # (K, 1)   f32   -0.5 * ||e||^2 (resident)

    K = e.shape[0]
    TN = xt.shape[1]

    # score = e·x - 0.5||e||^2 : argmax over codes == argmin of squared distance
    # (||x||^2 is constant per column and cannot change the argmin).
    # bf16 inputs, f32 accumulation on the MXU; bias add in f32.
    s = jnp.dot(e, xt, preferred_element_type=jnp.float32) + bias   # (K, TN) f32

    # Running (best score, best index) carry over K in K_CHUNK-row chunks.
    # Strict '>' keeps the earliest chunk on ties; the final min-index keeps
    # the earliest row, matching torch.argmin's first-occurrence tie-break.
    n_chunks = K // K_CHUNK
    chunk_iota = jax.lax.broadcasted_iota(jnp.int32, (K_CHUNK, TN), 0)
    best_val = s[0:K_CHUNK, :]
    best_idx = chunk_iota
    for c in range(1, n_chunks):
        cur = s[c * K_CHUNK:(c + 1) * K_CHUNK, :]
        take = cur > best_val
        best_val = jnp.where(take, cur, best_val)
        best_idx = jnp.where(take, chunk_iota + c * K_CHUNK, best_idx)

    col_max = jnp.max(best_val, axis=0, keepdims=True)               # (1, TN)
    idx = jnp.min(jnp.where(best_val >= col_max, best_idx, K),
                  axis=0, keepdims=True)                             # (1, TN) int32
    idx_ref[...] = idx       # lane-dense full-width store


def _round_up(x, m):
    return ((x + m - 1) // m) * m


def vector_quantizer(x_nchw, embedding, commitment_cost=COMMITMENT_COST):
    B, C, H, W = x_nchw.shape
    D = C
    K, D_e = embedding.shape
    assert D == D_e
    assert K % K_CHUNK == 0 and K >= K_CHUNK

    emb = embedding.astype(jnp.float32)
    N = B * H * W

    # x^T (D, N): column n <-> row n of the NHWC-flattened input.
    x_t = jnp.transpose(x_nchw, (1, 0, 2, 3)).reshape(D, N).astype(jnp.float32)

    # Adaptive column tile: multiple of 128 lanes, <= ROW_TILE, and split so
    # the (parallel) grid has >= 2 steps whenever N allows (v7x has 2 TCs).
    TN = min(ROW_TILE, _round_up(N, LANE))
    if N > LANE:
        TN = min(TN, _round_up(pl.cdiv(N, 2), LANE))
    num_tiles = pl.cdiv(N, TN)
    N_pad = num_tiles * TN

    x_t_b16 = x_t.astype(jnp.bfloat16)          # bf16 feed for the MXU
    if N_pad != N:
        x_t_b16 = jnp.pad(x_t_b16, ((0, 0), (0, N_pad - N)))

    e_b16 = emb.astype(jnp.bfloat16)                        # (K, D) resident codebook
    bias = (-0.5 * jnp.sum(emb * emb, axis=1))[:, None]     # (K, 1) f32

    idx_pad = pl.pallas_call(
        vq_argmin_kernel,
        out_shape=jax.ShapeDtypeStruct((1, N_pad), jnp.int32),
        grid_spec=pltpu.PrefetchScalarGridSpec(
            num_scalar_prefetch=0,
            grid=(num_tiles,),
            in_specs=[
                pl.BlockSpec((D, TN), lambda i: (0, i)),    # x^T column tile
                pl.BlockSpec((K, D), lambda i: (0, 0)),     # codebook (block idx fixed)
                pl.BlockSpec((K, 1), lambda i: (0, 0)),     # -0.5||e||^2
            ],
            out_specs=pl.BlockSpec((1, TN), lambda i: (0, i)),
        ),
        compiler_params=pltpu.CompilerParams(
            dimension_semantics=("parallel",)),
        cost_estimate=pl.CostEstimate(
            flops=2 * N_pad * K * D,
            transcendentals=0,
            bytes_accessed=2 * D * N_pad + 2 * K * D + 4 * K + 4 * N_pad),
    )(x_t_b16, e_b16, bias)

    idx = idx_pad[0, :N]                                    # (N,) int32

    # ---- wrapper-side glue on the (N,) indices (cheap vs. the kernel) ----
    quantized_t = jnp.take(emb, idx, axis=0).T              # (D, N) f32 gather
    diff = quantized_t - x_t
    mse = jnp.mean(diff * diff)
    e_latent_loss = mse          # F.mse_loss(quantized.detach(), inputs)
    q_latent_loss = mse          # F.mse_loss(quantized, inputs.detach())
    loss = q_latent_loss + commitment_cost * e_latent_loss

    # TODO(synk): straight-through estimator / detach split between the loss
    # terms needs a custom_vjp; forward values are identical, forward-only here.
    quantized_nchw = jnp.transpose(quantized_t.reshape(D, B, H, W), (1, 0, 2, 3))

    # Perplexity from a K-bin histogram (avoids reducing the dense one-hot).
    counts = jnp.zeros((K,), jnp.float32).at[idx].add(1.0)
    avg_probs = counts / N
    perplexity = jnp.exp(-jnp.sum(avg_probs * jnp.log(avg_probs + 1e-10)))

    # The module returns the dense one-hot encodings, so materialize them here.
    encodings = jax.nn.one_hot(idx, K, dtype=jnp.float32)   # (N, K)
    return loss, quantized_nchw, perplexity, encodings


if __name__ == "__main__":
    key = jax.random.PRNGKey(0)
    k_emb, k_x = jax.random.split(key)

    # nn.Embedding(num_embeddings, embedding_dim).weight.uniform_(-1/K, 1/K)
    embedding = jax.random.uniform(
        k_emb, (NUM_EMBEDDINGS, EMBEDDING_DIM), jnp.float32,
        minval=-1.0 / NUM_EMBEDDINGS, maxval=1.0 / NUM_EMBEDDINGS)

    # small NCHW input consistent with the module: channels == embedding_dim
    x = jax.random.normal(k_x, (2, EMBEDDING_DIM, 8, 8), jnp.float32)

    loss, quantized, perplexity, encodings = jax.block_until_ready(
        jax.jit(vector_quantizer, static_argnums=2)(x, embedding, COMMITMENT_COST))

    B, C, H, W = x.shape
    N = B * H * W
    K = NUM_EMBEDDINGS

    # ---- sanity checks (tolerant to the documented bf16 matmul rounding) ----
    assert encodings.shape == (N, K)
    assert jnp.allclose(jnp.sum(encodings, axis=1), 1.0)
    idx_k = jnp.argmax(encodings, axis=1)

    # chosen codes must be (near-)optimal under the exact f32 distance
    xf = jnp.transpose(x, (0, 2, 3, 1)).reshape(-1, C)                  # (N, D) f32
    d_f32 = (jnp.sum(xf ** 2, axis=1, keepdims=True)
             + jnp.sum(embedding ** 2, axis=1)
             - 2.0 * xf @ embedding.T)                                  # (N, K)
    d_sel = jnp.take_along_axis(d_f32, idx_k[:, None], axis=1)[:, 0]
    assert bool(jnp.all(d_sel <= jnp.min(d_f32, axis=1) + 5e-3))

    # quantized / loss must be self-consistent with the chosen indices
    q_ref = embedding[idx_k].reshape(B, H, W, C).transpose(0, 3, 1, 2)
    assert jnp.allclose(quantized, q_ref, atol=1e-6)
    mse_ref = jnp.mean((q_ref - x) ** 2)
    assert jnp.allclose(loss, mse_ref * (1.0 + COMMITMENT_COST), atol=1e-5)
    assert bool(jnp.isfinite(perplexity)) and 1.0 <= float(perplexity) <= K + 1e-3

    print("KERNEL_OK")
</pallas_src>

<mosaic_0001>
module attributes {stable_mosaic.version = 11 : i64} {
  func.func private @main(%arg0: i32) attributes {dimension_semantics = [#tpu.dimension_semantics<core_parallel>], iteration_bounds = array<i64: 2>, tpu.core_type = #tpu.core_type<sc_scalar_subcore>, window_params = []} {
    return
  }
}

module attributes {stable_mosaic.version = 11 : i64} {
  func.func private @main(%arg0: i32) attributes {dimension_semantics = [#tpu.dimension_semantics<core_parallel>], iteration_bounds = array<i64: 2>, tpu.core_type = #tpu.core_type<sc_scalar_subcore>, window_params = []} {
    return
  }
}

module attributes {stable_mosaic.version = 11 : i64} {
  func.func @vq_argmin_kernel(%arg0: i32, %arg1: memref<64x128xbf16, #tpu.memory_space<vmem>>, %arg2: memref<512x64xbf16, #tpu.memory_space<vmem>>, %arg3: memref<512x1xf32, #tpu.memory_space<vmem>>, %arg4: memref<1x128xi32, #tpu.memory_space<vmem>>) attributes {dimension_semantics = [#tpu.dimension_semantics<parallel>], iteration_bounds = array<i64: 1>, scalar_prefetch = 0 : i64, scratch_operands = 0 : i64, tpu.core_type = #tpu.core_type<tc>, window_params = [{transform_indices = @transform_0, window_bounds = array<i64: 64, 128>}, {pipeline_mode = #tpu.pipeline_mode<synchronous>, transform_indices = @transform_1, window_bounds = array<i64: 512, 64>}, {pipeline_mode = #tpu.pipeline_mode<synchronous>, transform_indices = @transform_2, window_bounds = array<i64: 512, 1>}, {transform_indices = @transform_3, window_bounds = array<i64: 1, 128>}]} {
    %c0 = arith.constant 0 : index
    %c0_0 = arith.constant 0 : index
    %0 = vector.load %arg1[%c0, %c0_0] : memref<64x128xbf16, #tpu.memory_space<vmem>>, vector<64x128xbf16>
    %c0_1 = arith.constant 0 : index
    %c0_2 = arith.constant 0 : index
    %1 = vector.load %arg2[%c0_1, %c0_2] : memref<512x64xbf16, #tpu.memory_space<vmem>>, vector<512x64xbf16>
    %c0_3 = arith.constant 0 : index
    %c0_4 = arith.constant 0 : index
    %2 = vector.load %arg3[%c0_3, %c0_4] : memref<512x1xf32, #tpu.memory_space<vmem>>, vector<512x1xf32>
    %cst = arith.constant dense<0.000000e+00> : vector<512x128xf32>
    %3 = tpu.matmul %1, %0, %cst {dimension_numbers = #tpu.dot_dimension_numbers<[1], [0], [0], [1], [0, 0, 1, 1], [], []>} : vector<512x64xbf16>, vector<64x128xbf16>, vector<512x128xf32> -> vector<512x128xf32>
    %4 = vector.broadcast %2 : vector<512x1xf32> to vector<512x128xf32>
    %5 = arith.addf %3, %4 : vector<512x128xf32>
    %6 = tpu.iota {dimensions = array<i32: 0>} : vector<128x128xi32>
    %7 = vector.extract_strided_slice %5 {offsets = [0, 0], sizes = [128, 128], strides = [1, 1]} : vector<512x128xf32> to vector<128x128xf32>
    %8 = vector.extract_strided_slice %5 {offsets = [128, 0], sizes = [128, 128], strides = [1, 1]} : vector<512x128xf32> to vector<128x128xf32>
    %9 = arith.cmpf ogt, %8, %7 : vector<128x128xf32>
    %10 = arith.select %9, %8, %7 : vector<128x128xi1>, vector<128x128xf32>
    %c128_i32 = arith.constant 128 : i32
    %11 = vector.broadcast %c128_i32 : i32 to vector<128x128xi32>
    %12 = arith.addi %6, %11 : vector<128x128xi32>
    %13 = arith.select %9, %12, %6 : vector<128x128xi1>, vector<128x128xi32>
    %14 = vector.extract_strided_slice %5 {offsets = [256, 0], sizes = [128, 128], strides = [1, 1]} : vector<512x128xf32> to vector<128x128xf32>
    %15 = arith.cmpf ogt, %14, %10 : vector<128x128xf32>
    %16 = arith.select %15, %14, %10 : vector<128x128xi1>, vector<128x128xf32>
    %c256_i32 = arith.constant 256 : i32
    %17 = vector.broadcast %c256_i32 : i32 to vector<128x128xi32>
    %18 = arith.addi %6, %17 : vector<128x128xi32>
    %19 = arith.select %15, %18, %13 : vector<128x128xi1>, vector<128x128xi32>
    %20 = vector.extract_strided_slice %5 {offsets = [384, 0], sizes = [128, 128], strides = [1, 1]} : vector<512x128xf32> to vector<128x128xf32>
    %21 = arith.cmpf ogt, %20, %16 : vector<128x128xf32>
    %22 = arith.select %21, %20, %16 : vector<128x128xi1>, vector<128x128xf32>
    %c384_i32 = arith.constant 384 : i32
    %23 = vector.broadcast %c384_i32 : i32 to vector<128x128xi32>
    %24 = arith.addi %6, %23 : vector<128x128xi32>
    %25 = arith.select %21, %24, %19 : vector<128x128xi1>, vector<128x128xi32>
    %cst_5 = arith.constant dense<0xFF800000> : vector<128xf32>
    %26 = vector.multi_reduction <maximumf>, %22, %cst_5 [0] : vector<128x128xf32> to vector<128xf32>
    %27 = vector.shape_cast %26 : vector<128xf32> to vector<1x128xf32>
    %28 = vector.broadcast %27 : vector<1x128xf32> to vector<128x128xf32>
    %29 = arith.cmpf oge, %22, %28 : vector<128x128xf32>
    %c512_i32 = arith.constant 512 : i32
    %30 = vector.broadcast %c512_i32 : i32 to vector<128x128xi32>
    %31 = arith.select %29, %25, %30 : vector<128x128xi1>, vector<128x128xi32>
    %cst_6 = arith.constant dense<2147483647> : vector<128xi32>
    %32 = vector.multi_reduction <minsi>, %31, %cst_6 [0] : vector<128x128xi32> to vector<128xi32>
    %33 = vector.shape_cast %32 : vector<128xi32> to vector<1x128xi32>
    %c0_7 = arith.constant 0 : index
    %c0_8 = arith.constant 0 : index
    %34 = vector.load %arg4[%c0_7, %c0_8] : memref<1x128xi32, #tpu.memory_space<vmem>>, vector<1x128xi32>
    tpu.vector_store %arg4[%c0_7, %c0_8], %33 {strides = array<i32>} : memref<1x128xi32, #tpu.memory_space<vmem>>, vector<1x128xi32>,
    return
  }
  func.func @transform_0(%arg0: i32) -> (i32, i32) {
    %c0_i32 = arith.constant 0 : i32
    %c0_i32_0 = arith.constant 0 : i32
    return %c0_i32, %arg0 : i32, i32
  }
  func.func @transform_1(%arg0: i32) -> (i32, i32) {
    %c0_i32 = arith.constant 0 : i32
    %c0_i32_0 = arith.constant 0 : i32
    %c0_i32_1 = arith.constant 0 : i32
    return %c0_i32, %c0_i32_0 : i32, i32
  }
  func.func @transform_2(%arg0: i32) -> (i32, i32) {
    %c0_i32 = arith.constant 0 : i32
    %c0_i32_0 = arith.constant 0 : i32
    %c0_i32_1 = arith.constant 0 : i32
    return %c0_i32, %c0_i32_0 : i32, i32
  }
  func.func @transform_3(%arg0: i32) -> (i32, i32) {
    %c0_i32 = arith.constant 0 : i32
    %c0_i32_0 = arith.constant 0 : i32
    return %c0_i32, %arg0 : i32, i32
  }
}

</mosaic_0001>

<llo_original>
// kernel: vector_quantizer.1
$region0: #{vector_quantizer.1}
  #allocation0 [shape = 'u32[]', space=smem, size = 0x4, offset = 0x4, fixed_abs, tag = 'smem constant byte address 0x4 - core index']
  #allocation1 [shape = 'u32[144,128]{1,0:T(1,128)}', space=vmem, size = 0x12000, scoped, tag = 'internal scratch']
  %s0 = inlined_call_operand.vmem [shape: bf16[64,128], index: 0, kind: input, shape index: {}]
  %s1 = inlined_call_operand.vmem [shape: bf16[512,64], index: 1, kind: input, shape index: {}]
  %s2 = inlined_call_operand.vmem [shape: f32[512,1], index: 2, kind: input, shape index: {}]
  %s3 = inlined_call_operand.vmem [shape: s32[1,128], index: 3, kind: output, shape index: {}]
  %s4 = sld [smem:[#allocation0]]
  $region22: #{vector_quantizer.1} parent=0
    _
  %s6 = ssub.s32 1, %s4
  %s7 = scalar_select 0, %s6, %s4
  // Predicated region
  $region2: #{vector_quantizer.1} parent=0 // pred_check
    _
  $region3: #{vector_quantizer.1} parent=0 // pred_check_branch
    %9 = sbr.rel (0) target = $region5
  $region4: #{vector_quantizer.1} parent=0 // pred_region
    _
  $region5: #{vector_quantizer.1} parent=0 // pred_fallthru
    _
  // Predicated region
  $region6: #{vector_quantizer.1} parent=0 // pred_check
    _
  $region7: #{vector_quantizer.1} parent=0 // pred_check_branch
    %11 = sbr.rel (0) target = $region9
  $region8: #{vector_quantizer.1} parent=0 // pred_region
    _
  $region9: #{vector_quantizer.1} parent=0 // pred_fallthru
    _
  // Predicated region
  $region10: #{vector_quantizer.1} parent=0 // pred_check
    _
  $region11: #{vector_quantizer.1} parent=0 // pred_check_branch
    %13 = sbr.rel (0) target = $region13
  $region12: #{vector_quantizer.1} parent=0 // pred_region
    _
  $region13: #{vector_quantizer.1} parent=0 // pred_fallthru
    _
  %v15 = vld [vmem:[%s0] sm:$0xf]
  %v16 = vld [vmem:[%s0 + $0x4] sm:$0xf]
  %v17 = vld [vmem:[%s0 + $0x8] sm:$0xf]
  %v18 = vld [vmem:[%s0 + $0xc] sm:$0xf]
  %v19 = vld [vmem:[%s0 + $0x10] sm:$0xf]
  %v20 = vld [vmem:[%s0 + $0x14] sm:$0xf]
  %v21 = vld [vmem:[%s0 + $0x18] sm:$0xf]
  %v22 = vld [vmem:[%s0 + $0x1c] sm:$0xf]
  %v23 = vld [vmem:[%s1] sm:$0xf]
  %v24 = vld [vmem:[%s1 + $0x4] sm:$0xf]
  %v25 = vld [vmem:[%s1 + $0x8] sm:$0xf]
  %v26 = vld [vmem:[%s1 + $0xc] sm:$0xf]
  %v27 = vld [vmem:[%s1 + $0x10] sm:$0xf]
  %v28 = vld [vmem:[%s1 + $0x14] sm:$0xf]
  %v29 = vld [vmem:[%s1 + $0x18] sm:$0xf]
  %v30 = vld [vmem:[%s1 + $0x1c] sm:$0xf]
  %v31 = vld [vmem:[%s1 + $0x20] sm:$0xf]
  %v32 = vld [vmem:[%s1 + $0x24] sm:$0xf]
  %v33 = vld [vmem:[%s1 + $0x28] sm:$0xf]
  %v34 = vld [vmem:[%s1 + $0x2c] sm:$0xf]
  %v35 = vld [vmem:[%s1 + $0x30] sm:$0xf]
  %v36 = vld [vmem:[%s1 + $0x34] sm:$0xf]
  %v37 = vld [vmem:[%s1 + $0x38] sm:$0xf]
  %v38 = vld [vmem:[%s1 + $0x3c] sm:$0xf]
  %v39 = vld [vmem:[%s1 + $0x40] sm:$0xf]
  %v40 = vld [vmem:[%s1 + $0x44] sm:$0xf]
  %v41 = vld [vmem:[%s1 + $0x48] sm:$0xf]
  %v42 = vld [vmem:[%s1 + $0x4c] sm:$0xf]
  %v43 = vld [vmem:[%s1 + $0x50] sm:$0xf]
  %v44 = vld [vmem:[%s1 + $0x54] sm:$0xf]
  %v45 = vld [vmem:[%s1 + $0x58] sm:$0xf]
  %v46 = vld [vmem:[%s1 + $0x5c] sm:$0xf]
  %v47 = vld [vmem:[%s1 + $0x60] sm:$0xf]
  %v48 = vld [vmem:[%s1 + $0x64] sm:$0xf]
  %v49 = vld [vmem:[%s1 + $0x68] sm:$0xf]
  %v50 = vld [vmem:[%s1 + $0x6c] sm:$0xf]
  %v51 = vld [vmem:[%s1 + $0x70] sm:$0xf]
  %v52 = vld [vmem:[%s1 + $0x74] sm:$0xf]
  %v53 = vld [vmem:[%s1 + $0x78] sm:$0xf]
  %v54 = vld [vmem:[%s1 + $0x7c] sm:$0xf]
  %v55 = vld [vmem:[%s1 + $0x80] sm:$0xf]
  %v56 = vld [vmem:[%s1 + $0x84] sm:$0xf]
  %v57 = vld [vmem:[%s1 + $0x88] sm:$0xf]
  %v58 = vld [vmem:[%s1 + $0x8c] sm:$0xf]
  %v59 = vld [vmem:[%s1 + $0x90] sm:$0xf]
  %v60 = vld [vmem:[%s1 + $0x94] sm:$0xf]
  %v61 = vld [vmem:[%s1 + $0x98] sm:$0xf]
  %v62 = vld [vmem:[%s1 + $0x9c] sm:$0xf]
  %v63 = vld [vmem:[%s1 + $0xa0] sm:$0xf]
  %v64 = vld [vmem:[%s1 + $0xa4] sm:$0xf]
  %v65 = vld [vmem:[%s1 + $0xa8] sm:$0xf]
  %v66 = vld [vmem:[%s1 + $0xac] sm:$0xf]
  %v67 = vld [vmem:[%s1 + $0xb0] sm:$0xf]
  %v68 = vld [vmem:[%s1 + $0xb4] sm:$0xf]
  %v69 = vld [vmem:[%s1 + $0xb8] sm:$0xf]
  %v70 = vld [vmem:[%s1 + $0xbc] sm:$0xf]
  %v71 = vld [vmem:[%s1 + $0xc0] sm:$0xf]
  %v72 = vld [vmem:[%s1 + $0xc4] sm:$0xf]
  %v73 = vld [vmem:[%s1 + $0xc8] sm:$0xf]
  %v74 = vld [vmem:[%s1 + $0xcc] sm:$0xf]
  %v75 = vld [vmem:[%s1 + $0xd0] sm:$0xf]
  %v76 = vld [vmem:[%s1 + $0xd4] sm:$0xf]
  %v77 = vld [vmem:[%s1 + $0xd8] sm:$0xf]
  %v78 = vld [vmem:[%s1 + $0xdc] sm:$0xf]
  %v79 = vld [vmem:[%s1 + $0xe0] sm:$0xf]
  %v80 = vld [vmem:[%s1 + $0xe4] sm:$0xf]
  %v81 = vld [vmem:[%s1 + $0xe8] sm:$0xf]
  %v82 = vld [vmem:[%s1 + $0xec] sm:$0xf]
  %v83 = vld [vmem:[%s1 + $0xf0] sm:$0xf]
  %v84 = vld [vmem:[%s1 + $0xf4] sm:$0xf]
  %v85 = vld [vmem:[%s1 + $0xf8] sm:$0xf]
  %v86 = vld [vmem:[%s1 + $0xfc] sm:$0xf]
  %v87 = vld [vmem:[%s2] sm:$0xff]
  %v88 = vld [vmem:[%s2 + $0x8] sm:$0xff]
  %v89 = vld [vmem:[%s2 + $0x10] sm:$0xff]
  %v90 = vld [vmem:[%s2 + $0x18] sm:$0xff]
  %v91 = vld [vmem:[%s2 + $0x20] sm:$0xff]
  %v92 = vld [vmem:[%s2 + $0x28] sm:$0xff]
  %v93 = vld [vmem:[%s2 + $0x30] sm:$0xff]
  %v94 = vld [vmem:[%s2 + $0x38] sm:$0xff]
  %v95 = vld [vmem:[%s2 + $0x40] sm:$0xff]
  %v96 = vld [vmem:[%s2 + $0x48] sm:$0xff]
  %v97 = vld [vmem:[%s2 + $0x50] sm:$0xff]
  %v98 = vld [vmem:[%s2 + $0x58] sm:$0xff]
  %v99 = vld [vmem:[%s2 + $0x60] sm:$0xff]
  %v100 = vld [vmem:[%s2 + $0x68] sm:$0xff]
  %v101 = vld [vmem:[%s2 + $0x70] sm:$0xff]
  %v102 = vld [vmem:[%s2 + $0x78] sm:$0xff]
  %v103 = vld [vmem:[%s2 + $0x80] sm:$0xff]
  %v104 = vld [vmem:[%s2 + $0x88] sm:$0xff]
  %v105 = vld [vmem:[%s2 + $0x90] sm:$0xff]
  %v106 = vld [vmem:[%s2 + $0x98] sm:$0xff]
  %v107 = vld [vmem:[%s2 + $0xa0] sm:$0xff]
  %v108 = vld [vmem:[%s2 + $0xa8] sm:$0xff]
  %v109 = vld [vmem:[%s2 + $0xb0] sm:$0xff]
  %v110 = vld [vmem:[%s2 + $0xb8] sm:$0xff]
  %v111 = vld [vmem:[%s2 + $0xc0] sm:$0xff]
  %v112 = vld [vmem:[%s2 + $0xc8] sm:$0xff]
  %v113 = vld [vmem:[%s2 + $0xd0] sm:$0xff]
  %v114 = vld [vmem:[%s2 + $0xd8] sm:$0xff]
  %v115 = vld [vmem:[%s2 + $0xe0] sm:$0xff]
  %v116 = vld [vmem:[%s2 + $0xe8] sm:$0xff]
  %v117 = vld [vmem:[%s2 + $0xf0] sm:$0xff]
  %v118 = vld [vmem:[%s2 + $0xf8] sm:$0xff]
  %v119 = vld [vmem:[%s2 + $0x100] sm:$0xff]
  %v120 = vld [vmem:[%s2 + $0x108] sm:$0xff]
  %v121 = vld [vmem:[%s2 + $0x110] sm:$0xff]
  %v122 = vld [vmem:[%s2 + $0x118] sm:$0xff]
  %v123 = vld [vmem:[%s2 + $0x120] sm:$0xff]
  %v124 = vld [vmem:[%s2 + $0x128] sm:$0xff]
  %v125 = vld [vmem:[%s2 + $0x130] sm:$0xff]
  %v126 = vld [vmem:[%s2 + $0x138] sm:$0xff]
  %v127 = vld [vmem:[%s2 + $0x140] sm:$0xff]
  %v128 = vld [vmem:[%s2 + $0x148] sm:$0xff]
  %v129 = vld [vmem:[%s2 + $0x150] sm:$0xff]
  %v130 = vld [vmem:[%s2 + $0x158] sm:$0xff]
  %v131 = vld [vmem:[%s2 + $0x160] sm:$0xff]
  %v132 = vld [vmem:[%s2 + $0x168] sm:$0xff]
  %v133 = vld [vmem:[%s2 + $0x170] sm:$0xff]
  %v134 = vld [vmem:[%s2 + $0x178] sm:$0xff]
  %v135 = vld [vmem:[%s2 + $0x180] sm:$0xff]
  %v136 = vld [vmem:[%s2 + $0x188] sm:$0xff]
  %v137 = vld [vmem:[%s2 + $0x190] sm:$0xff]
  %v138 = vld [vmem:[%s2 + $0x198] sm:$0xff]
  %v139 = vld [vmem:[%s2 + $0x1a0] sm:$0xff]
  %v140 = vld [vmem:[%s2 + $0x1a8] sm:$0xff]
  %v141 = vld [vmem:[%s2 + $0x1b0] sm:$0xff]
  %v142 = vld [vmem:[%s2 + $0x1b8] sm:$0xff]
  %v143 = vld [vmem:[%s2 + $0x1c0] sm:$0xff]
  %v144 = vld [vmem:[%s2 + $0x1c8] sm:$0xff]
  %v145 = vld [vmem:[%s2 + $0x1d0] sm:$0xff]
  %v146 = vld [vmem:[%s2 + $0x1d8] sm:$0xff]
  %v147 = vld [vmem:[%s2 + $0x1e0] sm:$0xff]
  %v148 = vld [vmem:[%s2 + $0x1e8] sm:$0xff]
  %v149 = vld [vmem:[%s2 + $0x1f0] sm:$0xff]
  %v150 = vld [vmem:[%s2 + $0x1f8] sm:$0xff]
  %152 = vset.pattern.permute.xlu0 0
  %153 = vperm.xlu0 %152, %v87
  %v154 = vpop.permute.xlu0 %153
  %157 = vset.pattern.permute.xlu0 0
  %158 = vperm.xlu0 %157, %v88
  %v159 = vpop.permute.xlu0 %158
  %162 = vset.pattern.permute.xlu0 0
  %163 = vperm.xlu0 %162, %v89
  %v164 = vpop.permute.xlu0 %163
  %167 = vset.pattern.permute.xlu0 0
  %168 = vperm.xlu0 %167, %v90
  %v169 = vpop.permute.xlu0 %168
  %172 = vset.pattern.permute.xlu0 0
  %173 = vperm.xlu0 %172, %v91
  %v174 = vpop.permute.xlu0 %173
  %177 = vset.pattern.permute.xlu0 0
  %178 = vperm.xlu0 %177, %v92
  %v179 = vpop.permute.xlu0 %178
  %182 = vset.pattern.permute.xlu0 0
  %183 = vperm.xlu0 %182, %v93
  %v184 = vpop.permute.xlu0 %183
  %187 = vset.pattern.permute.xlu0 0
  %188 = vperm.xlu0 %187, %v94
  %v189 = vpop.permute.xlu0 %188
  %192 = vset.pattern.permute.xlu0 0
  %193 = vperm.xlu0 %192, %v95
  %v194 = vpop.permute.xlu0 %193
  %197 = vset.pattern.permute.xlu0 0
  %198 = vperm.xlu0 %197, %v96
  %v199 = vpop.permute.xlu0 %198
  %202 = vset.pattern.permute.xlu0 0
  %203 = vperm.xlu0 %202, %v97
  %v204 = vpop.permute.xlu0 %203
  %207 = vset.pattern.permute.xlu0 0
  %208 = vperm.xlu0 %207, %v98
  %v209 = vpop.permute.xlu0 %208
  %212 = vset.pattern.permute.xlu0 0
  %213 = vperm.xlu0 %212, %v99
  %v214 = vpop.permute.xlu0 %213
  %217 = vset.pattern.permute.xlu0 0
  %218 = vperm.xlu0 %217, %v100
  %v219 = vpop.permute.xlu0 %218
  %222 = vset.pattern.permute.xlu0 0
  %223 = vperm.xlu0 %222, %v101
  %v224 = vpop.permute.xlu0 %223
  %227 = vset.pattern.permute.xlu0 0
  %228 = vperm.xlu0 %227, %v102
  %v229 = vpop.permute.xlu0 %228
  %232 = vset.pattern.permute.xlu0 0
  %233 = vperm.xlu0 %232, %v103
  %v234 = vpop.permute.xlu0 %233
  %237 = vset.pattern.permute.xlu0 0
  %238 = vperm.xlu0 %237, %v104
  %v239 = vpop.permute.xlu0 %238
  %242 = vset.pattern.permute.xlu0 0
  %243 = vperm.xlu0 %242, %v105
  %v244 = vpop.permute.xlu0 %243
  %247 = vset.pattern.permute.xlu0 0
  %248 = vperm.xlu0 %247, %v106
  %v249 = vpop.permute.xlu0 %248
  %252 = vset.pattern.permute.xlu0 0
  %253 = vperm.xlu0 %252, %v107
  %v254 = vpop.permute.xlu0 %253
  %257 = vset.pattern.permute.xlu0 0
  %258 = vperm.xlu0 %257, %v108
  %v259 = vpop.permute.xlu0 %258
  %262 = vset.pattern.permute.xlu0 0
  %263 = vperm.xlu0 %262, %v109
  %v264 = vpop.permute.xlu0 %263
  %267 = vset.pattern.permute.xlu0 0
  %268 = vperm.xlu0 %267, %v110
  %v269 = vpop.permute.xlu0 %268
  %272 = vset.pattern.permute.xlu0 0
  %273 = vperm.xlu0 %272, %v111
  %v274 = vpop.permute.xlu0 %273
  %277 = vset.pattern.permute.xlu0 0
  %278 = vperm.xlu0 %277, %v112
  %v279 = vpop.permute.xlu0 %278
  %282 = vset.pattern.permute.xlu0 0
  %283 = vperm.xlu0 %282, %v113
  %v284 = vpop.permute.xlu0 %283
  %287 = vset.pattern.permute.xlu0 0
  %288 = vperm.xlu0 %287, %v114
  %v289 = vpop.permute.xlu0 %288
  %292 = vset.pattern.permute.xlu0 0
  %293 = vperm.xlu0 %292, %v115
  %v294 = vpop.permute.xlu0 %293
  %297 = vset.pattern.permute.xlu0 0
  %298 = vperm.xlu0 %297, %v116
  %v299 = vpop.permute.xlu0 %298
  %302 = vset.pattern.permute.xlu0 0
  %303 = vperm.xlu0 %302, %v117
  %v304 = vpop.permute.xlu0 %303
  %307 = vset.pattern.permute.xlu0 0
  %308 = vperm.xlu0 %307, %v118
  %v309 = vpop.permute.xlu0 %308
  %312 = vset.pattern.permute.xlu0 0
  %313 = vperm.xlu0 %312, %v119
  %v314 = vpop.permute.xlu0 %313
  %317 = vset.pattern.permute.xlu0 0
  %318 = vperm.xlu0 %317, %v120
  %v319 = vpop.permute.xlu0 %318
  %322 = vset.pattern.permute.xlu0 0
  %323 = vperm.xlu0 %322, %v121
  %v324 = vpop.permute.xlu0 %323
  %327 = vset.pattern.permute.xlu0 0
  %328 = vperm.xlu0 %327, %v122
  %v329 = vpop.permute.xlu0 %328
  %332 = vset.pattern.permute.xlu0 0
  %333 = vperm.xlu0 %332, %v123
  %v334 = vpop.permute.xlu0 %333
  %337 = vset.pattern.permute.xlu0 0
  %338 = vperm.xlu0 %337, %v124
  %v339 = vpop.permute.xlu0 %338
  %342 = vset.pattern.permute.xlu0 0
  %343 = vperm.xlu0 %342, %v125
  %v344 = vpop.permute.xlu0 %343
  %347 = vset.pattern.permute.xlu0 0
  %348 = vperm.xlu0 %347, %v126
  %v349 = vpop.permute.xlu0 %348
  %352 = vset.pattern.permute.xlu0 0
  %353 = vperm.xlu0 %352, %v127
  %v354 = vpop.permute.xlu0 %353
  %357 = vset.pattern.permute.xlu0 0
  %358 = vperm.xlu0 %357, %v128
  %v359 = vpop.permute.xlu0 %358
  %362 = vset.pattern.permute.xlu0 0
  %363 = vperm.xlu0 %362, %v129
  %v364 = vpop.permute.xlu0 %363
  %367 = vset.pattern.permute.xlu0 0
  %368 = vperm.xlu0 %367, %v130
  %v369 = vpop.permute.xlu0 %368
  %372 = vset.pattern.permute.xlu0 0
  %373 = vperm.xlu0 %372, %v131
  %v374 = vpop.permute.xlu0 %373
  %377 = vset.pattern.permute.xlu0 0
  %378 = vperm.xlu0 %377, %v132
  %v379 = vpop.permute.xlu0 %378
  %382 = vset.pattern.permute.xlu0 0
  %383 = vperm.xlu0 %382, %v133
  %v384 = vpop.permute.xlu0 %383
  %387 = vset.pattern.permute.xlu0 0
  %388 = vperm.xlu0 %387, %v134
  %v389 = vpop.permute.xlu0 %388
  %392 = vset.pattern.permute.xlu0 0
  %393 = vperm.xlu0 %392, %v135
  %v394 = vpop.permute.xlu0 %393
  %397 = vset.pattern.permute.xlu0 0
  %398 = vperm.xlu0 %397, %v136
  %v399 = vpop.permute.xlu0 %398
  %402 = vset.pattern.permute.xlu0 0
  %403 = vperm.xlu0 %402, %v137
  %v404 = vpop.permute.xlu0 %403
  %407 = vset.pattern.permute.xlu0 0
  %408 = vperm.xlu0 %407, %v138
  %v409 = vpop.permute.xlu0 %408
  %412 = vset.pattern.permute.xlu0 0
  %413 = vperm.xlu0 %412, %v139
  %v414 = vpop.permute.xlu0 %413
  %417 = vset.pattern.permute.xlu0 0
  %418 = vperm.xlu0 %417, %v140
  %v419 = vpop.permute.xlu0 %418
  %422 = vset.pattern.permute.xlu0 0
  %423 = vperm.xlu0 %422, %v141
  %v424 = vpop.permute.xlu0 %423
  %427 = vset.pattern.permute.xlu0 0
  %428 = vperm.xlu0 %427, %v142
  %v429 = vpop.permute.xlu0 %428
  %432 = vset.pattern.permute.xlu0 0
  %433 = vperm.xlu0 %432, %v143
  %v434 = vpop.permute.xlu0 %433
  %437 = vset.pattern.permute.xlu0 0
  %438 = vperm.xlu0 %437, %v144
  %v439 = vpop.permute.xlu0 %438
  %442 = vset.pattern.permute.xlu0 0
  %443 = vperm.xlu0 %442, %v145
  %v444 = vpop.permute.xlu0 %443
  %447 = vset.pattern.permute.xlu0 0
  %448 = vperm.xlu0 %447, %v146
  %v449 = vpop.permute.xlu0 %448
  %452 = vset.pattern.permute.xlu0 0
  %453 = vperm.xlu0 %452, %v147
  %v454 = vpop.permute.xlu0 %453
  %457 = vset.pattern.permute.xlu0 0
  %458 = vperm.xlu0 %457, %v148
  %v459 = vpop.permute.xlu0 %458
  %462 = vset.pattern.permute.xlu0 0
  %463 = vperm.xlu0 %462, %v149
  %v464 = vpop.permute.xlu0 %463
  %467 = vset.pattern.permute.xlu0 0
  %468 = vperm.xlu0 %467, %v150
  %v469 = vpop.permute.xlu0 %468
  %v535 = vunpack.c.l.b16 %v23
  %v536 = vunpack.c.l.b16 %v24
  %v537 = vunpack.c.l.b16 %v25
  %v538 = vunpack.c.l.b16 %v26
  %v539 = vunpack.c.l.b16 %v27
  %v540 = vunpack.c.l.b16 %v28
  %v541 = vunpack.c.l.b16 %v29
  %v542 = vunpack.c.l.b16 %v30
  %v543 = vunpack.c.l.b16 %v31
  %v544 = vunpack.c.l.b16 %v32
  %v545 = vunpack.c.l.b16 %v33
  %v546 = vunpack.c.l.b16 %v34
  %v547 = vunpack.c.l.b16 %v35
  %v548 = vunpack.c.l.b16 %v36
  %v549 = vunpack.c.l.b16 %v37
  %v550 = vunpack.c.l.b16 %v38
  %v551 = vunpack.c.l.b16 %v39
  %v552 = vunpack.c.l.b16 %v40
  %v553 = vunpack.c.l.b16 %v41
  %v554 = vunpack.c.l.b16 %v42
  %v555 = vunpack.c.l.b16 %v43
  %v556 = vunpack.c.l.b16 %v44
  %v557 = vunpack.c.l.b16 %v45
  %v558 = vunpack.c.l.b16 %v46
  %v559 = vunpack.c.l.b16 %v47
  %v560 = vunpack.c.l.b16 %v48
  %v561 = vunpack.c.l.b16 %v49
  %v562 = vunpack.c.l.b16 %v50
  %v563 = vunpack.c.l.b16 %v51
  %v564 = vunpack.c.l.b16 %v52
  %v565 = vunpack.c.l.b16 %v53
  %v566 = vunpack.c.l.b16 %v54
  %v567 = vunpack.c.l.b16 %v55
  %v568 = vunpack.c.l.b16 %v56
  %v569 = vunpack.c.l.b16 %v57
  %v570 = vunpack.c.l.b16 %v58
  %v571 = vunpack.c.l.b16 %v59
  %v572 = vunpack.c.l.b16 %v60
  %v573 = vunpack.c.l.b16 %v61
  %v574 = vunpack.c.l.b16 %v62
  %v575 = vunpack.c.l.b16 %v63
  %v576 = vunpack.c.l.b16 %v64
  %v577 = vunpack.c.l.b16 %v65
  %v578 = vunpack.c.l.b16 %v66
  %v579 = vunpack.c.l.b16 %v67
  %v580 = vunpack.c.l.b16 %v68
  %v581 = vunpack.c.l.b16 %v69
  %v582 = vunpack.c.l.b16 %v70
  %v583 = vunpack.c.l.b16 %v71
  %v584 = vunpack.c.l.b16 %v72
  %v585 = vunpack.c.l.b16 %v73
  %v586 = vunpack.c.l.b16 %v74
  %v587 = vunpack.c.l.b16 %v75
  %v588 = vunpack.c.l.b16 %v76
  %v589 = vunpack.c.l.b16 %v77
  %v590 = vunpack.c.l.b16 %v78
  %v591 = vunpack.c.l.b16 %v79
  %v592 = vunpack.c.l.b16 %v80
  %v593 = vunpack.c.l.b16 %v81
  %v594 = vunpack.c.l.b16 %v82
  %v595 = vunpack.c.l.b16 %v83
  %v596 = vunpack.c.l.b16 %v84
  %v597 = vunpack.c.l.b16 %v85
  %v598 = vunpack.c.l.b16 %v86
  %v599 = vpack.c.b16 %v536, %v535
  %v600 = vpack.c.b16 %v538, %v537
  %v601 = vpack.c.b16 %v540, %v539
  %v602 = vpack.c.b16 %v542, %v541
  %v603 = vpack.c.b16 %v544, %v543
  %v604 = vpack.c.b16 %v546, %v545
  %v605 = vpack.c.b16 %v548, %v547
  %v606 = vpack.c.b16 %v550, %v549
  %v607 = vpack.c.b16 %v552, %v551
  %v608 = vpack.c.b16 %v554, %v553
  %v609 = vpack.c.b16 %v556, %v555
  %v610 = vpack.c.b16 %v558, %v557
  %v611 = vpack.c.b16 %v560, %v559
  %v612 = vpack.c.b16 %v562, %v561
  %v613 = vpack.c.b16 %v564, %v563
  %v614 = vpack.c.b16 %v566, %v565
  %v615 = vpack.c.b16 %v568, %v567
  %v616 = vpack.c.b16 %v570, %v569
  %v617 = vpack.c.b16 %v572, %v571
  %v618 = vpack.c.b16 %v574, %v573
  %v619 = vpack.c.b16 %v576, %v575
  %v620 = vpack.c.b16 %v578, %v577
  %v621 = vpack.c.b16 %v580, %v579
  %v622 = vpack.c.b16 %v582, %v581
  %v623 = vpack.c.b16 %v584, %v583
  %v624 = vpack.c.b16 %v586, %v585
  %v625 = vpack.c.b16 %v588, %v587
  %v626 = vpack.c.b16 %v590, %v589
  %v627 = vpack.c.b16 %v592, %v591
  %v628 = vpack.c.b16 %v594, %v593
  %v629 = vpack.c.b16 %v596, %v595
  %v630 = vpack.c.b16 %v598, %v597
  %v639 = vunpack.c.l.b16 %v15
  %v640 = vunpack.c.l.b16 %v16
  %v641 = vunpack.c.l.b16 %v17
  %v642 = vunpack.c.l.b16 %v18
  %v643 = vunpack.c.l.b16 %v19
  %v644 = vunpack.c.l.b16 %v20
  %v645 = vunpack.c.l.b16 %v21
  %v646 = vunpack.c.l.b16 %v22
  %v647 = vpack.c.b16 %v640, %v639
  %v648 = vpack.c.b16 %v642, %v641
  %v649 = vpack.c.b16 %v644, %v643
  %v650 = vpack.c.b16 %v646, %v645
  %vm655 = vcmask 523264
  %v657 = vsel %vm655, %v599, 0
  %v660 = vsel %vm655, %v600, 0
  %v663 = vsel %vm655, %v601, 0
  %v666 = vsel %vm655, %v602, 0
  %v669 = vsel %vm655, %v603, 0
  %v672 = vsel %vm655, %v604, 0
  %v675 = vsel %vm655, %v605, 0
  %v678 = vsel %vm655, %v606, 0
  %v681 = vsel %vm655, %v607, 0
  %v684 = vsel %vm655, %v608, 0
  %v687 = vsel %vm655, %v609, 0
  %v690 = vsel %vm655, %v610, 0
  %v693 = vsel %vm655, %v611, 0
  %v696 = vsel %vm655, %v612, 0
  %v699 = vsel %vm655, %v613, 0
  %v702 = vsel %vm655, %v614, 0
  %v705 = vsel %vm655, %v615, 0
  %v708 = vsel %vm655, %v616, 0
  %v711 = vsel %vm655, %v617, 0
  %v714 = vsel %vm655, %v618, 0
  %v717 = vsel %vm655, %v619, 0
  %v720 = vsel %vm655, %v620, 0
  %v723 = vsel %vm655, %v621, 0
  %v726 = vsel %vm655, %v622, 0
  %v729 = vsel %vm655, %v623, 0
  %v732 = vsel %vm655, %v624, 0
  %v735 = vsel %vm655, %v625, 0
  %v738 = vsel %vm655, %v626, 0
  %v741 = vsel %vm655, %v627, 0
  %v744 = vsel %vm655, %v628, 0
  %v747 = vsel %vm655, %v629, 0
  %v750 = vsel %vm655, %v630, 0
  %752 = vmatprep.subr.bf16.mxu0 0
  %753 = vmatpush1.bf16.msra.mxu0 %v647
  %754 = vmatprep.subr.bf16.mxu0 0
  %755 = vmatpush1.bf16.msra.mxu0 %v648
  %756 = vmatprep.subr.bf16.mxu0 0
  %757 = vmatpush1.bf16.msra.mxu0 %v649
  %758 = vmatprep.subr.bf16.mxu0 0
  %759 = vmatpush1.bf16.msra.mxu0 %v650
  %760 = vmatprep.subr.bf16.mxu0 0
  %761 = vmatpush1.bf16.msra.mxu0 0
  %762 = vmatprep.subr.bf16.mxu0 0
  %763 = vmatpush1.bf16.msra.mxu0 0
  %764 = vmatprep.subr.bf16.mxu0 0
  %765 = vmatpush1.bf16.msra.mxu0 0
  %766 = vmatprep.subr.bf16.mxu0 0
  %767 = vmatpush1.bf16.msra.mxu0 0
  %768 = vmatprep.subr.bf16.mxu0 0
  %769 = vmatpush1.bf16.msra.mxu0 0
  %770 = vmatprep.subr.bf16.mxu0 0
  %771 = vmatpush1.bf16.msra.mxu0 0
  %772 = vmatprep.subr.bf16.mxu0 0
  %773 = vmatpush1.bf16.msra.mxu0 0
  %774 = vmatprep.subr.bf16.mxu0 0
  %775 = vmatpush1.bf16.msra.mxu0 0
  %776 = vmatprep.subr.bf16.mxu0 0
  %777 = vmatpush1.bf16.msra.mxu0 0
  %778 = vmatprep.subr.bf16.mxu0 0
  %779 = vmatpush1.bf16.msra.mxu0 0
  %780 = vmatprep.subr.bf16.mxu0 0
  %781 = vmatpush1.bf16.msra.mxu0 0
  %782 = vmatprep.subr.bf16.mxu0 0
  %783 = vmatpush1.bf16.msra.mxu0 0
  %784 = vmatprep.mubr.bf16.mxu0 0
  %785 = vmatmul.mubr.bf16.gmra.mrb[0].mxu0 %v657
  %v786 = vpop.f32.mrb[0].mxu0
  %v787 = vadd.f32 %v154, %v786
  %v788 = vpop.f32.mrb[0].mxu0
  %v789 = vpop.f32.mrb[0].mxu0
  %v790 = vadd.f32 %v159, %v789
  %v791 = vpop.f32.mrb[0].mxu0
  %792 = vmatprep.mubr.bf16.mxu0 0
  %793 = vmatmul.mubr.bf16.gmra.mrb[0].mxu0 %v660
  %v794 = vpop.f32.mrb[0].mxu0
  %v795 = vadd.f32 %v164, %v794
  %v796 = vpop.f32.mrb[0].mxu0
  %v797 = vpop.f32.mrb[0].mxu0
  %v798 = vadd.f32 %v169, %v797
  %v799 = vpop.f32.mrb[0].mxu0
  %800 = vmatprep.mubr.bf16.mxu0 0
  %801 = vmatmul.mubr.bf16.gmra.mrb[0].mxu0 %v663
  %v802 = vpop.f32.mrb[0].mxu0
  %v803 = vadd.f32 %v174, %v802
  %v804 = vpop.f32.mrb[0].mxu0
  %v805 = vpop.f32.mrb[0].mxu0
  %v806 = vadd.f32 %v179, %v805
  %v807 = vpop.f32.mrb[0].mxu0
  %808 = vmatprep.mubr.bf16.mxu0 0
  %809 = vmatmul.mubr.bf16.gmra.mrb[0].mxu0 %v666
  %v810 = vpop.f32.mrb[0].mxu0
  %v811 = vadd.f32 %v184, %v810
  %v812 = vpop.f32.mrb[0].mxu0
  %v813 = vpop.f32.mrb[0].mxu0
  %v814 = vadd.f32 %v189, %v813
  %v815 = vpop.f32.mrb[0].mxu0
  %816 = vmatprep.mubr.bf16.mxu0 0
  %817 = vmatmul.mubr.bf16.gmra.mrb[0].mxu0 %v669
  %v818 = vpop.f32.mrb[0].mxu0
  %v819 = vadd.f32 %v194, %v818
  %v820 = vpop.f32.mrb[0].mxu0
  %v821 = vpop.f32.mrb[0].mxu0
  %v822 = vadd.f32 %v199, %v821
  %v823 = vpop.f32.mrb[0].mxu0
  %824 = vmatprep.mubr.bf16.mxu0 0
  %825 = vmatmul.mubr.bf16.gmra.mrb[0].mxu0 %v672
  %v826 = vpop.f32.mrb[0].mxu0
  %v827 = vadd.f32 %v204, %v826
  %v828 = vpop.f32.mrb[0].mxu0
  %v829 = vpop.f32.mrb[0].mxu0
  %v830 = vadd.f32 %v209, %v829
  %v831 = vpop.f32.mrb[0].mxu0
  %832 = vmatprep.mubr.bf16.mxu0 0
  %833 = vmatmul.mubr.bf16.gmra.mrb[0].mxu0 %v675
  %v834 = vpop.f32.mrb[0].mxu0
  %v835 = vadd.f32 %v214, %v834
  %v836 = vpop.f32.mrb[0].mxu0
  %v837 = vpop.f32.mrb[0].mxu0
  %v838 = vadd.f32 %v219, %v837
  %v839 = vpop.f32.mrb[0].mxu0
  %840 = vmatprep.mubr.bf16.mxu0 0
  %841 = vmatmul.mubr.bf16.gmra.mrb[0].mxu0 %v678
  %v842 = vpop.f32.mrb[0].mxu0
  %v843 = vadd.f32 %v224, %v842
  %v844 = vpop.f32.mrb[0].mxu0
  %v845 = vpop.f32.mrb[0].mxu0
  %v846 = vadd.f32 %v229, %v845
  %v847 = vpop.f32.mrb[0].mxu0
  %848 = vmatprep.mubr.bf16.mxu0 0
  %849 = vmatmul.mubr.bf16.gmra.mrb[0].mxu0 %v681
  %v850 = vpop.f32.mrb[0].mxu0
  %v851 = vadd.f32 %v234, %v850
  %v852 = vpop.f32.mrb[0].mxu0
  %v853 = vpop.f32.mrb[0].mxu0
  %v854 = vadd.f32 %v239, %v853
  %v855 = vpop.f32.mrb[0].mxu0
  %856 = vmatprep.mubr.bf16.mxu0 0
  %857 = vmatmul.mubr.bf16.gmra.mrb[0].mxu0 %v684
  %v858 = vpop.f32.mrb[0].mxu0
  %v859 = vadd.f32 %v244, %v858
  %v860 = vpop.f32.mrb[0].mxu0
  %v861 = vpop.f32.mrb[0].mxu0
  %v862 = vadd.f32 %v249, %v861
  %v863 = vpop.f32.mrb[0].mxu0
  %864 = vmatprep.mubr.bf16.mxu0 0
  %865 = vmatmul.mubr.bf16.gmra.mrb[0].mxu0 %v687
  %v866 = vpop.f32.mrb[0].mxu0
  %v867 = vadd.f32 %v254, %v866
  %v868 = vpop.f32.mrb[0].mxu0
  %v869 = vpop.f32.mrb[0].mxu0
  %v870 = vadd.f32 %v259, %v869
  %v871 = vpop.f32.mrb[0].mxu0
  %872 = vmatprep.mubr.bf16.mxu0 0
  %873 = vmatmul.mubr.bf16.gmra.mrb[0].mxu0 %v690
  %v874 = vpop.f32.mrb[0].mxu0
  %v875 = vadd.f32 %v264, %v874
  %v876 = vpop.f32.mrb[0].mxu0
  %v877 = vpop.f32.mrb[0].mxu0
  %v878 = vadd.f32 %v269, %v877
  %v879 = vpop.f32.mrb[0].mxu0
  %880 = vmatprep.mubr.bf16.mxu0 0
  %881 = vmatmul.mubr.bf16.gmra.mrb[0].mxu0 %v693
  %v882 = vpop.f32.mrb[0].mxu0
  %v883 = vadd.f32 %v274, %v882
  %v884 = vpop.f32.mrb[0].mxu0
  %v885 = vpop.f32.mrb[0].mxu0
  %v886 = vadd.f32 %v279, %v885
  %v887 = vpop.f32.mrb[0].mxu0
  %888 = vmatprep.mubr.bf16.mxu0 0
  %889 = vmatmul.mubr.bf16.gmra.mrb[0].mxu0 %v696
  %v890 = vpop.f32.mrb[0].mxu0
  %v891 = vadd.f32 %v284, %v890
  %v892 = vpop.f32.mrb[0].mxu0
  %v893 = vpop.f32.mrb[0].mxu0
  %v894 = vadd.f32 %v289, %v893
  %v895 = vpop.f32.mrb[0].mxu0
  %896 = vmatprep.mubr.bf16.mxu0 0
  %897 = vmatmul.mubr.bf16.gmra.mrb[0].mxu0 %v699
  %v898 = vpop.f32.mrb[0].mxu0
  %v899 = vadd.f32 %v294, %v898
  %v900 = vpop.f32.mrb[0].mxu0
  %v901 = vpop.f32.mrb[0].mxu0
  %v902 = vadd.f32 %v299, %v901
  %v903 = vpop.f32.mrb[0].mxu0
  %904 = vmatprep.mubr.bf16.mxu0 0
  %905 = vmatmul.mubr.bf16.gmra.mrb[0].mxu0 %v702
  %v906 = vpop.f32.mrb[0].mxu0
  %v907 = vadd.f32 %v304, %v906
  %v908 = vpop.f32.mrb[0].mxu0
  %v909 = vpop.f32.mrb[0].mxu0
  %v910 = vadd.f32 %v309, %v909
  %v911 = vpop.f32.mrb[0].mxu0
  %912 = vmatprep.mubr.bf16.mxu0 0
  %913 = vmatmul.mubr.bf16.gmra.mrb[0].mxu0 %v705
  %v914 = vpop.f32.mrb[0].mxu0
  %v915 = vadd.f32 %v314, %v914
  %v916 = vpop.f32.mrb[0].mxu0
  %v917 = vpop.f32.mrb[0].mxu0
  %v918 = vadd.f32 %v319, %v917
  %v919 = vpop.f32.mrb[0].mxu0
  %920 = vmatprep.mubr.bf16.mxu0 0
  %921 = vmatmul.mubr.bf16.gmra.mrb[0].mxu0 %v708
  %v922 = vpop.f32.mrb[0].mxu0
  %v923 = vadd.f32 %v324, %v922
  %v924 = vpop.f32.mrb[0].mxu0
  %v925 = vpop.f32.mrb[0].mxu0
  %v926 = vadd.f32 %v329, %v925
  %v927 = vpop.f32.mrb[0].mxu0
  %928 = vmatprep.mubr.bf16.mxu0 0
  %929 = vmatmul.mubr.bf16.gmra.mrb[0].mxu0 %v711
  %v930 = vpop.f32.mrb[0].mxu0
  %v931 = vadd.f32 %v334, %v930
  %v932 = vpop.f32.mrb[0].mxu0
  %v933 = vpop.f32.mrb[0].mxu0
  %v934 = vadd.f32 %v339, %v933
  %v935 = vpop.f32.mrb[0].mxu0
  %936 = vmatprep.mubr.bf16.mxu0 0
  %937 = vmatmul.mubr.bf16.gmra.mrb[0].mxu0 %v714
  %v938 = vpop.f32.mrb[0].mxu0
  %v939 = vadd.f32 %v344, %v938
  %v940 = vpop.f32.mrb[0].mxu0
  %v941 = vpop.f32.mrb[0].mxu0
  %v942 = vadd.f32 %v349, %v941
  %v943 = vpop.f32.mrb[0].mxu0
  %944 = vmatprep.mubr.bf16.mxu0 0
  %945 = vmatmul.mubr.bf16.gmra.mrb[0].mxu0 %v717
  %v946 = vpop.f32.mrb[0].mxu0
  %v947 = vadd.f32 %v354, %v946
  %v948 = vpop.f32.mrb[0].mxu0
  %v949 = vpop.f32.mrb[0].mxu0
  %v950 = vadd.f32 %v359, %v949
  %v951 = vpop.f32.mrb[0].mxu0
  %952 = vmatprep.mubr.bf16.mxu0 0
  %953 = vmatmul.mubr.bf16.gmra.mrb[0].mxu0 %v720
  %v954 = vpop.f32.mrb[0].mxu0
  %v955 = vadd.f32 %v364, %v954
  %v956 = vpop.f32.mrb[0].mxu0
  %v957 = vpop.f32.mrb[0].mxu0
  %v958 = vadd.f32 %v369, %v957
  %v959 = vpop.f32.mrb[0].mxu0
  %960 = vmatprep.mubr.bf16.mxu0 0
  %961 = vmatmul.mubr.bf16.gmra.mrb[0].mxu0 %v723
  %v962 = vpop.f32.mrb[0].mxu0
  %v963 = vadd.f32 %v374, %v962
  %v964 = vpop.f32.mrb[0].mxu0
  %v965 = vpop.f32.mrb[0].mxu0
  %v966 = vadd.f32 %v379, %v965
  %v967 = vpop.f32.mrb[0].mxu0
  %968 = vmatprep.mubr.bf16.mxu0 0
  %969 = vmatmul.mubr.bf16.gmra.mrb[0].mxu0 %v726
  %v970 = vpop.f32.mrb[0].mxu0
  %v971 = vadd.f32 %v384, %v970
  %v972 = vpop.f32.mrb[0].mxu0
  %v973 = vpop.f32.mrb[0].mxu0
  %v974 = vadd.f32 %v389, %v973
  %v975 = vpop.f32.mrb[0].mxu0
  %976 = vmatprep.mubr.bf16.mxu0 0
  %977 = vmatmul.mubr.bf16.gmra.mrb[0].mxu0 %v729
  %v978 = vpop.f32.mrb[0].mxu0
  %v979 = vadd.f32 %v394, %v978
  %v980 = vpop.f32.mrb[0].mxu0
  %v981 = vpop.f32.mrb[0].mxu0
  %v982 = vadd.f32 %v399, %v981
  %v983 = vpop.f32.mrb[0].mxu0
  %984 = vmatprep.mubr.bf16.mxu0 0
  %985 = vmatmul.mubr.bf16.gmra.mrb[0].mxu0 %v732
  %v986 = vpop.f32.mrb[0].mxu0
  %v987 = vadd.f32 %v404, %v986
  %v988 = vpop.f32.mrb[0].mxu0
  %v989 = vpop.f32.mrb[0].mxu0
  %v990 = vadd.f32 %v409, %v989
  %v991 = vpop.f32.mrb[0].mxu0
  %992 = vmatprep.mubr.bf16.mxu0 0
  %993 = vmatmul.mubr.bf16.gmra.mrb[0].mxu0 %v735
  %v994 = vpop.f32.mrb[0].mxu0
  %v995 = vadd.f32 %v414, %v994
  %v996 = vpop.f32.mrb[0].mxu0
  %v997 = vpop.f32.mrb[0].mxu0
  %v998 = vadd.f32 %v419, %v997
  %v999 = vpop.f32.mrb[0].mxu0
  %1000 = vmatprep.mubr.bf16.mxu0 0
  %1001 = vmatmul.mubr.bf16.gmra.mrb[0].mxu0 %v738
  %v1002 = vpop.f32.mrb[0].mxu0
  %v1003 = vadd.f32 %v424, %v1002
  %v1004 = vpop.f32.mrb[0].mxu0
  %v1005 = vpop.f32.mrb[0].mxu0
  %v1006 = vadd.f32 %v429, %v1005
  %v1007 = vpop.f32.mrb[0].mxu0
  %1008 = vmatprep.mubr.bf16.mxu0 0
  %1009 = vmatmul.mubr.bf16.gmra.mrb[0].mxu0 %v741
  %v1010 = vpop.f32.mrb[0].mxu0
  %v1011 = vadd.f32 %v434, %v1010
  %v1012 = vpop.f32.mrb[0].mxu0
  %v1013 = vpop.f32.mrb[0].mxu0
  %v1014 = vadd.f32 %v439, %v1013
  %v1015 = vpop.f32.mrb[0].mxu0
  %1016 = vmatprep.mubr.bf16.mxu0 0
  %1017 = vmatmul.mubr.bf16.gmra.mrb[0].mxu0 %v744
  %v1018 = vpop.f32.mrb[0].mxu0
  %v1019 = vadd.f32 %v444, %v1018
  %v1020 = vpop.f32.mrb[0].mxu0
  %v1021 = vpop.f32.mrb[0].mxu0
  %v1022 = vadd.f32 %v449, %v1021
  %v1023 = vpop.f32.mrb[0].mxu0
  %1024 = vmatprep.mubr.bf16.mxu0 0
  %1025 = vmatmul.mubr.bf16.gmra.mrb[0].mxu0 %v747
  %v1026 = vpop.f32.mrb[0].mxu0
  %v1027 = vadd.f32 %v454, %v1026
  %v1028 = vpop.f32.mrb[0].mxu0
  %v1029 = vpop.f32.mrb[0].mxu0
  %v1030 = vadd.f32 %v459, %v1029
  %v1031 = vpop.f32.mrb[0].mxu0
  %1032 = vmatprep.mubr.bf16.mxu0 0
  %1033 = vmatmul.mubr.bf16.gmra.mrb[0].mxu0 %v750
  %v1034 = vpop.f32.mrb[0].mxu0
  %v1035 = vadd.f32 %v464, %v1034
  %v1036 = vpop.f32.mrb[0].mxu0
  %v1037 = vpop.f32.mrb[0].mxu0
  %v1038 = vadd.f32 %v469, %v1037
  %v1039 = vpop.f32.mrb[0].mxu0
  %1040 = vdwg.mxu0
  %v1041 = vlaneseq
  %v1042 = vshrl.u32 %v1041, 7
  %v1043 = vadd.s32 %v1042, 8
  %v1044 = vadd.s32 %v1042, 16
  %v1045 = vadd.s32 %v1042, 24
  %v1046 = vadd.s32 %v1042, 32
  %v1047 = vadd.s32 %v1042, 40
  %v1048 = vadd.s32 %v1042, 48
  %v1049 = vadd.s32 %v1042, 56
  %v1050 = vadd.s32 %v1042, 64
  %v1051 = vadd.s32 %v1042, 72
  %v1052 = vadd.s32 %v1042, 80
  %v1053 = vadd.s32 %v1042, 88
  %v1054 = vadd.s32 %v1042, 96
  %v1055 = vadd.s32 %v1042, 104
  %v1056 = vadd.s32 %v1042, 112
  %v1057 = vadd.s32 %v1042, 120
  %vm1058 = vcmp.gt.f32.partialorder %v851, %v787
  %vm1059 = vcmp.gt.f32.partialorder %v854, %v790
  %vm1060 = vcmp.gt.f32.partialorder %v859, %v795
  %vm1061 = vcmp.gt.f32.partialorder %v862, %v798
  %vm1062 = vcmp.gt.f32.partialorder %v867, %v803
  %vm1063 = vcmp.gt.f32.partialorder %v870, %v806
  %vm1064 = vcmp.gt.f32.partialorder %v875, %v811
  %vm1065 = vcmp.gt.f32.partialorder %v878, %v814
  %vm1066 = vcmp.gt.f32.partialorder %v883, %v819
  %vm1067 = vcmp.gt.f32.partialorder %v886, %v822
  %vm1068 = vcmp.gt.f32.partialorder %v891, %v827
  %vm1069 = vcmp.gt.f32.partialorder %v894, %v830
  %vm1070 = vcmp.gt.f32.partialorder %v899, %v835
  %vm1071 = vcmp.gt.f32.partialorder %v902, %v838
  %vm1072 = vcmp.gt.f32.partialorder %v907, %v843
  %vm1073 = vcmp.gt.f32.partialorder %v910, %v846
  %v1074 = vsel %vm1058, %v851, %v787
  %v1075 = vsel %vm1059, %v854, %v790
  %v1076 = vsel %vm1060, %v859, %v795
  %v1077 = vsel %vm1061, %v862, %v798
  %v1078 = vsel %vm1062, %v867, %v803
  %v1079 = vsel %vm1063, %v870, %v806
  %v1080 = vsel %vm1064, %v875, %v811
  %v1081 = vsel %vm1065, %v878, %v814
  %v1082 = vsel %vm1066, %v883, %v819
  %v1083 = vsel %vm1067, %v886, %v822
  %v1084 = vsel %vm1068, %v891, %v827
  %v1085 = vsel %vm1069, %v894, %v830
  %v1086 = vsel %vm1070, %v899, %v835
  %v1087 = vsel %vm1071, %v902, %v838
  %v1088 = vsel %vm1072, %v907, %v843
  %v1089 = vsel %vm1073, %v910, %v846
  %v1090 = vadd.s32 %v1042, 128
  %v1091 = vadd.s32 %v1043, 128
  %v1092 = vadd.s32 %v1044, 128
  %v1093 = vadd.s32 %v1045, 128
  %v1094 = vadd.s32 %v1046, 128
  %v1095 = vadd.s32 %v1047, 128
  %v1096 = vadd.s32 %v1048, 128
  %v1097 = vadd.s32 %v1049, 128
  %v1098 = vadd.s32 %v1050, 128
  %v1099 = vadd.s32 %v1051, 128
  %v1100 = vadd.s32 %v1052, 128
  %v1101 = vadd.s32 %v1053, 128
  %v1102 = vadd.s32 %v1054, 128
  %v1103 = vadd.s32 %v1055, 128
  %v1104 = vadd.s32 %v1056, 128
  %v1105 = vadd.s32 %v1057, 128
  %v1106 = vsel %vm1058, %v1090, %v1042
  %v1107 = vsel %vm1059, %v1091, %v1043
  %v1108 = vsel %vm1060, %v1092, %v1044
  %v1109 = vsel %vm1061, %v1093, %v1045
  %v1110 = vsel %vm1062, %v1094, %v1046
  %v1111 = vsel %vm1063, %v1095, %v1047
  %v1112 = vsel %vm1064, %v1096, %v1048
  %v1113 = vsel %vm1065, %v1097, %v1049
  %v1114 = vsel %vm1066, %v1098, %v1050
  %v1115 = vsel %vm1067, %v1099, %v1051
  %v1116 = vsel %vm1068, %v1100, %v1052
  %v1117 = vsel %vm1069, %v1101, %v1053
  %v1118 = vsel %vm1070, %v1102, %v1054
  %v1119 = vsel %vm1071, %v1103, %v1055
  %v1120 = vsel %vm1072, %v1104, %v1056
  %v1121 = vsel %vm1073, %v1105, %v1057
  %vm1122 = vcmp.gt.f32.partialorder %v915, %v1074
  %vm1123 = vcmp.gt.f32.partialorder %v918, %v1075
  %vm1124 = vcmp.gt.f32.partialorder %v923, %v1076
  %vm1125 = vcmp.gt.f32.partialorder %v926, %v1077
  %vm1126 = vcmp.gt.f32.partialorder %v931, %v1078
  %vm1127 = vcmp.gt.f32.partialorder %v934, %v1079
  %vm1128 = vcmp.gt.f32.partialorder %v939, %v1080
  %vm1129 = vcmp.gt.f32.partialorder %v942, %v1081
  %vm1130 = vcmp.gt.f32.partialorder %v947, %v1082
  %vm1131 = vcmp.gt.f32.partialorder %v950, %v1083
  %vm1132 = vcmp.gt.f32.partialorder %v955, %v1084
  %vm1133 = vcmp.gt.f32.partialorder %v958, %v1085
  %vm1134 = vcmp.gt.f32.partialorder %v963, %v1086
  %vm1135 = vcmp.gt.f32.partialorder %v966, %v1087
  %vm1136 = vcmp.gt.f32.partialorder %v971, %v1088
  %vm1137 = vcmp.gt.f32.partialorder %v974, %v1089
  %v1138 = vsel %vm1122, %v915, %v1074
  %v1139 = vsel %vm1123, %v918, %v1075
  %v1140 = vsel %vm1124, %v923, %v1076
  %v1141 = vsel %vm1125, %v926, %v1077
  %v1142 = vsel %vm1126, %v931, %v1078
  %v1143 = vsel %vm1127, %v934, %v1079
  %v1144 = vsel %vm1128, %v939, %v1080
  %v1145 = vsel %vm1129, %v942, %v1081
  %v1146 = vsel %vm1130, %v947, %v1082
  %v1147 = vsel %vm1131, %v950, %v1083
  %v1148 = vsel %vm1132, %v955, %v1084
  %v1149 = vsel %vm1133, %v958, %v1085
  %v1150 = vsel %vm1134, %v963, %v1086
  %v1151 = vsel %vm1135, %v966, %v1087
  %v1152 = vsel %vm1136, %v971, %v1088
  %v1153 = vsel %vm1137, %v974, %v1089
  %v1154 = vadd.s32 %v1042, 256
  %v1155 = vadd.s32 %v1043, 256
  %v1156 = vadd.s32 %v1044, 256
  %v1157 = vadd.s32 %v1045, 256
  %v1158 = vadd.s32 %v1046, 256
  %v1159 = vadd.s32 %v1047, 256
  %v1160 = vadd.s32 %v1048, 256
  %v1161 = vadd.s32 %v1049, 256
  %v1162 = vadd.s32 %v1050, 256
  %v1163 = vadd.s32 %v1051, 256
  %v1164 = vadd.s32 %v1052, 256
  %v1165 = vadd.s32 %v1053, 256
  %v1166 = vadd.s32 %v1054, 256
  %v1167 = vadd.s32 %v1055, 256
  %v1168 = vadd.s32 %v1056, 256
  %v1169 = vadd.s32 %v1057, 256
  %v1170 = vsel %vm1122, %v1154, %v1106
  %v1171 = vsel %vm1123, %v1155, %v1107
  %v1172 = vsel %vm1124, %v1156, %v1108
  %v1173 = vsel %vm1125, %v1157, %v1109
  %v1174 = vsel %vm1126, %v1158, %v1110
  %v1175 = vsel %vm1127, %v1159, %v1111
  %v1176 = vsel %vm1128, %v1160, %v1112
  %v1177 = vsel %vm1129, %v1161, %v1113
  %v1178 = vsel %vm1130, %v1162, %v1114
  %v1179 = vsel %vm1131, %v1163, %v1115
  %v1180 = vsel %vm1132, %v1164, %v1116
  %v1181 = vsel %vm1133, %v1165, %v1117
  %v1182 = vsel %vm1134, %v1166, %v1118
  %v1183 = vsel %vm1135, %v1167, %v1119
  %v1184 = vsel %vm1136, %v1168, %v1120
  %v1185 = vsel %vm1137, %v1169, %v1121
  %vm1186 = vcmp.gt.f32.partialorder %v979, %v1138
  %vm1187 = vcmp.gt.f32.partialorder %v982, %v1139
  %vm1188 = vcmp.gt.f32.partialorder %v987, %v1140
  %vm1189 = vcmp.gt.f32.partialorder %v990, %v1141
  %vm1190 = vcmp.gt.f32.partialorder %v995, %v1142
  %vm1191 = vcmp.gt.f32.partialorder %v998, %v1143
  %vm1192 = vcmp.gt.f32.partialorder %v1003, %v1144
  %vm1193 = vcmp.gt.f32.partialorder %v1006, %v1145
  %vm1194 = vcmp.gt.f32.partialorder %v1011, %v1146
  %vm1195 = vcmp.gt.f32.partialorder %v1014, %v1147
  %vm1196 = vcmp.gt.f32.partialorder %v1019, %v1148
  %vm1197 = vcmp.gt.f32.partialorder %v1022, %v1149
  %vm1198 = vcmp.gt.f32.partialorder %v1027, %v1150
  %vm1199 = vcmp.gt.f32.partialorder %v1030, %v1151
  %vm1200 = vcmp.gt.f32.partialorder %v1035, %v1152
  %vm1201 = vcmp.gt.f32.partialorder %v1038, %v1153
  %v1202 = vsel %vm1186, %v979, %v1138
  %v1203 = vsel %vm1187, %v982, %v1139
  %v1204 = vsel %vm1188, %v987, %v1140
  %v1205 = vsel %vm1189, %v990, %v1141
  %v1206 = vsel %vm1190, %v995, %v1142
  %v1207 = vsel %vm1191, %v998, %v1143
  %v1208 = vsel %vm1192, %v1003, %v1144
  %v1209 = vsel %vm1193, %v1006, %v1145
  %v1210 = vsel %vm1194, %v1011, %v1146
  %v1211 = vsel %vm1195, %v1014, %v1147
  %v1212 = vsel %vm1196, %v1019, %v1148
  %v1213 = vsel %vm1197, %v1022, %v1149
  %v1214 = vsel %vm1198, %v1027, %v1150
  %v1215 = vsel %vm1199, %v1030, %v1151
  %v1216 = vsel %vm1200, %v1035, %v1152
  %v1217 = vsel %vm1201, %v1038, %v1153
  %v1218 = vadd.s32 %v1042, 384
  %v1219 = vadd.s32 %v1043, 384
  %v1220 = vadd.s32 %v1044, 384
  %v1221 = vadd.s32 %v1045, 384
  %v1222 = vadd.s32 %v1046, 384
  %v1223 = vadd.s32 %v1047, 384
  %v1224 = vadd.s32 %v1048, 384
  %v1225 = vadd.s32 %v1049, 384
  %v1226 = vadd.s32 %v1050, 384
  %v1227 = vadd.s32 %v1051, 384
  %v1228 = vadd.s32 %v1052, 384
  %v1229 = vadd.s32 %v1053, 384
  %v1230 = vadd.s32 %v1054, 384
  %v1231 = vadd.s32 %v1055, 384
  %v1232 = vadd.s32 %v1056, 384
  %v1233 = vadd.s32 %v1057, 384
  %v1234 = vsel %vm1186, %v1218, %v1170
  %v1235 = vsel %vm1187, %v1219, %v1171
  %v1236 = vsel %vm1188, %v1220, %v1172
  %v1237 = vsel %vm1189, %v1221, %v1173
  %v1238 = vsel %vm1190, %v1222, %v1174
  %v1239 = vsel %vm1191, %v1223, %v1175
  %v1240 = vsel %vm1192, %v1224, %v1176
  %v1241 = vsel %vm1193, %v1225, %v1177
  %v1242 = vsel %vm1194, %v1226, %v1178
  %v1243 = vsel %vm1195, %v1227, %v1179
  %v1244 = vsel %vm1196, %v1228, %v1180
  %v1245 = vsel %vm1197, %v1229, %v1181
  %v1246 = vsel %vm1198, %v1230, %v1182
  %v1247 = vsel %vm1199, %v1231, %v1183
  %v1248 = vsel %vm1200, %v1232, %v1184
  %v1249 = vsel %vm1201, %v1233, %v1185
  %v1250 = vmax.f32 %v1202, %v1206
  %v1251 = vmax.f32 %v1203, %v1207
  %v1252 = vmax.f32 %v1204, %v1208
  %v1253 = vmax.f32 %v1205, %v1209
  %v1254 = vmax.f32 %v1250, %v1210
  %v1255 = vmax.f32 %v1251, %v1211
  %v1256 = vmax.f32 %v1252, %v1212
  %v1257 = vmax.f32 %v1253, %v1213
  %v1258 = vmax.f32 %v1254, %v1214
  %v1259 = vmax.f32 %v1255, %v1215
  %v1260 = vmax.f32 %v1256, %v1216
  %v1261 = vmax.f32 %v1257, %v1217
  %v1262 = vmax.f32 %v1258, %v1259
  %v1263 = vmax.f32 %v1260, %v1261
  %v1264 = vmax.f32 %v1262, %v1263
  %v1265 = vrot.slane %v1264, 4
  %v1266 = vmax.f32 %v1264, %v1265
  %v1267 = vrot.slane %v1266, 2
  %v1268 = vmax.f32 %v1266, %v1267
  %v1269 = vrot.slane %v1268, 1
  %v1270 = vmax.f32 %v1268, %v1269
  %vm1271 = vcmp.ge.f32.partialorder %v1202, %v1270
  %vm1272 = vcmp.ge.f32.partialorder %v1203, %v1270
  %vm1273 = vcmp.ge.f32.partialorder %v1204, %v1270
  %vm1274 = vcmp.ge.f32.partialorder %v1205, %v1270
  %vm1275 = vcmp.ge.f32.partialorder %v1206, %v1270
  %vm1276 = vcmp.ge.f32.partialorder %v1207, %v1270
  %vm1277 = vcmp.ge.f32.partialorder %v1208, %v1270
  %vm1278 = vcmp.ge.f32.partialorder %v1209, %v1270
  %vm1279 = vcmp.ge.f32.partialorder %v1210, %v1270
  %vm1280 = vcmp.ge.f32.partialorder %v1211, %v1270
  %vm1281 = vcmp.ge.f32.partialorder %v1212, %v1270
  %vm1282 = vcmp.ge.f32.partialorder %v1213, %v1270
  %vm1283 = vcmp.ge.f32.partialorder %v1214, %v1270
  %vm1284 = vcmp.ge.f32.partialorder %v1215, %v1270
  %vm1285 = vcmp.ge.f32.partialorder %v1216, %v1270
  %vm1286 = vcmp.ge.f32.partialorder %v1217, %v1270
  %v1287 = vsel %vm1271, %v1234, 512
  %v1288 = vsel %vm1272, %v1235, 512
  %v1289 = vsel %vm1273, %v1236, 512
  %v1290 = vsel %vm1274, %v1237, 512
  %v1291 = vsel %vm1275, %v1238, 512
  %v1292 = vsel %vm1276, %v1239, 512
  %v1293 = vsel %vm1277, %v1240, 512
  %v1294 = vsel %vm1278, %v1241, 512
  %v1295 = vsel %vm1279, %v1242, 512
  %v1296 = vsel %vm1280, %v1243, 512
  %v1297 = vsel %vm1281, %v1244, 512
  %v1298 = vsel %vm1282, %v1245, 512
  %v1299 = vsel %vm1283, %v1246, 512
  %v1300 = vsel %vm1284, %v1247, 512
  %v1301 = vsel %vm1285, %v1248, 512
  %v1302 = vsel %vm1286, %v1249, 512
  %vm1303 = vcmp.lt.s32.totalorder %v1287, %v1291
  %v1304 = vsel %vm1303, %v1287, %v1291
  %vm1305 = vcmp.lt.s32.totalorder %v1288, %v1292
  %v1306 = vsel %vm1305, %v1288, %v1292
  %vm1307 = vcmp.lt.s32.totalorder %v1289, %v1293
  %v1308 = vsel %vm1307, %v1289, %v1293
  %vm1309 = vcmp.lt.s32.totalorder %v1290, %v1294
  %v1310 = vsel %vm1309, %v1290, %v1294
  %vm1311 = vcmp.lt.s32.totalorder %v1304, %v1295
  %v1312 = vsel %vm1311, %v1304, %v1295
  %vm1313 = vcmp.lt.s32.totalorder %v1306, %v1296
  %v1314 = vsel %vm1313, %v1306, %v1296
  %vm1315 = vcmp.lt.s32.totalorder %v1308, %v1297
  %v1316 = vsel %vm1315, %v1308, %v1297
  %vm1317 = vcmp.lt.s32.totalorder %v1310, %v1298
  %v1318 = vsel %vm1317, %v1310, %v1298
  %vm1319 = vcmp.lt.s32.totalorder %v1312, %v1299
  %v1320 = vsel %vm1319, %v1312, %v1299
  %vm1321 = vcmp.lt.s32.totalorder %v1314, %v1300
  %v1322 = vsel %vm1321, %v1314, %v1300
  %vm1323 = vcmp.lt.s32.totalorder %v1316, %v1301
  %v1324 = vsel %vm1323, %v1316, %v1301
  %vm1325 = vcmp.lt.s32.totalorder %v1318, %v1302
  %v1326 = vsel %vm1325, %v1318, %v1302
  %vm1327 = vcmp.lt.s32.totalorder %v1320, %v1322
  %v1328 = vsel %vm1327, %v1320, %v1322
  %vm1329 = vcmp.lt.s32.totalorder %v1324, %v1326
  %v1330 = vsel %vm1329, %v1324, %v1326
  %vm1331 = vcmp.lt.s32.totalorder %v1328, %v1330
  %v1332 = vsel %vm1331, %v1328, %v1330
  %v1333 = vrot.slane %v1332, 4
  %vm1334 = vcmp.lt.s32.totalorder %v1332, %v1333
  %v1335 = vsel %vm1334, %v1332, %v1333
  %v1336 = vrot.slane %v1335, 2
  %vm1337 = vcmp.lt.s32.totalorder %v1335, %v1336
  %v1338 = vsel %vm1337, %v1335, %v1336
  %v1339 = vrot.slane %v1338, 1
  %vm1340 = vcmp.lt.s32.totalorder %v1338, %v1339
  %v1341 = vsel %vm1340, %v1338, %v1339
  %1342 = vst [vmem:[%s3] sm:$0x1] %v1341
  // Predicated region
  $region14: #{vector_quantizer.1} parent=0 // pred_check
    _
  $region15: #{vector_quantizer.1} parent=0 // pred_check_branch
    %1344 = sbr.rel (0) target = $region17
  $region16: #{vector_quantizer.1} parent=0 // pred_region
    _
  $region17: #{vector_quantizer.1} parent=0 // pred_fallthru
    _
  // Predicated region
  $region18: #{vector_quantizer.1} parent=0 // pred_check
    _
  $region19: #{vector_quantizer.1} parent=0 // pred_check_branch
    %1346 = sbr.rel (0) target = $region21
  $region20: #{vector_quantizer.1} parent=0 // pred_region
    _
  $region21: #{vector_quantizer.1} parent=0 // pred_fallthru
    _

</llo_original>
